<compile_context>
chip_gen: v6e
topology: v6e:2x2x1
jax: 0.10.0
libtpu: 0.0.40
codegen_flags: <defaults>
</compile_context>

<pallas_src>
import jax
import jax.numpy as jnp
from jax.experimental import pallas as pl
from jax.experimental.pallas import tpu as pltpu


def _copy_kernel(x_ref, o_ref):
    # Straight VMEM tile copy — the only "work" a squeeze data path can have.
    o_ref[...] = x_ref[...]


# ~2 MiB per tile: with Pallas double-buffering (2 in + 2 out buffers) that is
# ~8 MiB of VMEM, comfortably inside the default scoped limit on v5e (16 MiB),
# v6e (32 MiB) and v7x (32 MiB of 64 MiB physical).
_TARGET_TILE_BYTES = 2 * 1024 * 1024


def _lane_dense_2d(x: jax.Array, n: int) -> jax.Array:
    """Flatten to (rows, lane) with lane a large multiple of 128 when possible.

    For a raw copy the logical last dim is irrelevant, so pick the layout the
    DMA/VPU likes (dense, unmasked 128-wide lane stores).
    """
    for lane in (2048, 1024, 512, 256, 128):
        if n % lane == 0:
            return x.reshape(n // lane, lane)
    # Odd total size: single full-extent row (legal full-extent lane block).
    return x.reshape(1, n)


def _pallas_copy_2d(x2d: jax.Array) -> jax.Array:
    """Row-tiled, pipelined identity copy of a 2D array through Pallas."""
    rows, cols = x2d.shape
    bytes_per_row = max(cols * x2d.dtype.itemsize, 1)

    if rows >= 8 and cols % 128 == 0:
        # Row tile targeting ~2 MiB, multiple of 8 sublanes.
        tile_r = max(8, min(rows, _TARGET_TILE_BYTES // bytes_per_row))
        tile_r = (tile_r // 8) * 8
    else:
        # Small / odd shapes: single full-extent block (always legal).
        tile_r = rows

    grid = (pl.cdiv(rows, tile_r),)

    return pl.pallas_call(
        _copy_kernel,
        out_shape=jax.ShapeDtypeStruct((rows, cols), x2d.dtype),
        grid_spec=pl.GridSpec(
            grid=grid,
            in_specs=[pl.BlockSpec((tile_r, cols), lambda i: (i, 0))],
            out_specs=pl.BlockSpec((tile_r, cols), lambda i: (i, 0)),
        ),
        # Alias input and output HBM buffers: the "copy" writes into the same
        # allocation, so no extra HBM footprint and (under a donating jit) no
        # extra buffer traffic.
        input_output_aliases={0: 0},
        compiler_params=pltpu.CompilerParams(
            # Independent row tiles -> shard across both TCs on v7x (no-op on
            # single-TC v5e/v6e).
            dimension_semantics=("parallel",),
            vmem_limit_bytes=32 * 1024 * 1024,
        ),
    )(x2d)


def squeeze_forward(x: jax.Array, dim: int = -1) -> jax.Array:
    """Equivalent of torch.Tensor.squeeze(dim=dim) (module default dim=-1)."""
    ndim = x.ndim
    ax = dim if dim >= 0 else ndim + dim

    if ndim == 0 or ax < 0 or ax >= ndim or x.shape[ax] != 1:
        # PyTorch squeeze(dim) is a no-op when the dim is not size 1.
        # Zero data movement, no kernel launch.
        return x

    out_shape = x.shape[:ax] + x.shape[ax + 1 :]
    n = x.size
    if n == 0:
        return x.reshape(out_shape)

    # NOTE: removing a size-1 axis never reorders data, so the zero-cost
    # implementation is simply `x.reshape(out_shape)`.  The Pallas copy below
    # is kept as the explicit on-device data path and is tuned to hit HBM
    # roofline (lane-dense tiles, aliased in/out, parallel grid).
    flat = _lane_dense_2d(x, n)
    out2d = _pallas_copy_2d(flat)
    return out2d.reshape(out_shape)


if __name__ == "__main__":
    key = jax.random.PRNGKey(0)

    # (batch=2, channels=4, spatial=16, 1) -> squeeze(dim=-1) -> (2, 4, 16)
    x = jax.random.normal(key, (2, 4, 16, 1), dtype=jnp.float32)
    ref = jnp.squeeze(x, axis=-1)
    y = jax.block_until_ready(squeeze_forward(x, dim=-1))
    assert y.shape == (2, 4, 16), y.shape
    assert y.dtype == x.dtype
    assert bool(jnp.all(y == ref))

    # "dim size != 1" branch is a pure no-op (no kernel launch).
    x2 = jax.random.normal(jax.random.PRNGKey(1), (2, 4, 16), dtype=jnp.float32)
    y2 = jax.block_until_ready(squeeze_forward(x2, dim=-1))
    assert y2.shape == x2.shape
    assert bool(jnp.all(y2 == x2))

    # A shape large enough to exercise the row-tiled (rows >= 8) path.
    x3 = jax.random.normal(jax.random.PRNGKey(2), (8, 16, 128, 1), dtype=jnp.float32)
    ref3 = jnp.squeeze(x3, axis=-1)
    y3 = jax.block_until_ready(squeeze_forward(x3, dim=-1))
    assert y3.shape == (8, 16, 128), y3.shape
    assert bool(jnp.all(y3 == ref3))

    print("KERNEL_OK")
</pallas_src>

<mosaic_0001>
module attributes {stable_mosaic.version = 11 : i64} {
  func.func @_copy_kernel(%arg0: i32, %arg1: memref<1x128xf32, #tpu.memory_space<vmem>>, %arg2: memref<1x128xf32, #tpu.memory_space<vmem>>) attributes {dimension_semantics = [#tpu.dimension_semantics<parallel>], iteration_bounds = array<i64: 1>, scalar_prefetch = 0 : i64, scratch_operands = 0 : i64, tpu.core_type = #tpu.core_type<tc>, window_params = [{transform_indices = @transform_0, window_bounds = array<i64: 1, 128>}, {transform_indices = @transform_1, window_bounds = array<i64: 1, 128>}]} {
    %c0 = arith.constant 0 : index
    %c0_0 = arith.constant 0 : index
    %0 = vector.load %arg1[%c0, %c0_0] : memref<1x128xf32, #tpu.memory_space<vmem>>, vector<1x128xf32>
    %c0_1 = arith.constant 0 : index
    %c0_2 = arith.constant 0 : index
    %1 = vector.load %arg2[%c0_1, %c0_2] : memref<1x128xf32, #tpu.memory_space<vmem>>, vector<1x128xf32>
    tpu.vector_store %arg2[%c0_1, %c0_2], %0 {strides = array<i32>} : memref<1x128xf32, #tpu.memory_space<vmem>>, vector<1x128xf32>,
    return
  }
  func.func @transform_0(%arg0: i32) -> (i32, i32) {
    %c0_i32 = arith.constant 0 : i32
    %c0_i32_0 = arith.constant 0 : i32
    return %arg0, %c0_i32 : i32, i32
  }
  func.func @transform_1(%arg0: i32) -> (i32, i32) {
    %c0_i32 = arith.constant 0 : i32
    %c0_i32_0 = arith.constant 0 : i32
    return %arg0, %c0_i32 : i32, i32
  }
}

</mosaic_0001>

<llo_original>
// kernel: tpu_custom_call.1
$region0: #{tpu_custom_call.1}
  #allocation0 [shape = 'u32[]', space=smem, size = 0x4, offset = 0x4, fixed_abs, tag = 'smem constant byte address 0x4 - core index']
  #allocation1 [shape = 'u32[144,128]{1,0:T(1,128)}', space=vmem, size = 0x12000, scoped, tag = 'internal scratch']
  %s0 = inlined_call_operand.hbm [shape: f32[1,128], index: 0, kind: input, shape index: {}, may-alias: {0,1}]
  %s1 = inlined_call_operand.hbm [shape: f32[1,128], index: 1, kind: output, shape index: {}, may-alias: {0,1}]
  %s2 = sld [smem:[#allocation0]]
  $region18: #{tpu_custom_call.1} parent=0
    _
  %s4 = ssub.s32 1, %s2
  %s5 = scalar_select 0, %s4, %s2
  $region1: #{tpu_custom_call.1} parent=0
    #allocation2 [shape = 'u8[512]{0}', space=vmem, size = 0x400, scoped, tag = 'input window, operand 0, single buffered']
    #allocation3 [shape = 's32[1]{0}', space=sflag, size = 0x4, scoped, tag = 'scoped memory for tpu_custom_call.1']
    #allocation4 [shape = 's32[1]{0}', space=sflag, size = 0x4, scoped, tag = 'scoped memory for tpu_custom_call.1']
    #allocation5 [shape = 'u8[512]{0}', space=vmem, size = 0x400, scoped, tag = 'output window, operand 0, single buffered']
    %6 = vsyncpa [#allocation3], 0
    %7 = vsyncpa [#allocation4], 0
    // Predicated region
    $region2: #{tpu_custom_call.1} parent=1 // pred_check
      _
    $region3: #{tpu_custom_call.1} parent=1 // pred_check_branch
      %9 = sbr.rel (0) target = $region5
    $region4: #{tpu_custom_call.1} parent=1 // pred_region
      %s11 = ssub.s32 16, 16
      %12 = vsyncadd [#allocation3], %s11
      %s14 = sshll.u32 [#allocation2], 4
      %s15 = int_to_ptr.vmem [resolvable:$true] %s14
      %17 = dma.hbm_to_vmem [thread:$0]  %s0, 16, %s15, [#allocation3]
    $region5: #{tpu_custom_call.1} parent=1 // pred_fallthru
      _
    // Predicated region
    $region6: #{tpu_custom_call.1} parent=1 // pred_check
      _
    $region7: #{tpu_custom_call.1} parent=1 // pred_check_branch
      %19 = sbr.rel (0) target = $region9
    $region8: #{tpu_custom_call.1} parent=1 // pred_region
      %20 = dma.done [#allocation3], 16
    $region9: #{tpu_custom_call.1} parent=1 // pred_fallthru
      _
    %v21 = vld [vmem:[#allocation2] sm:$0x1]
    %22 = vst [vmem:[#allocation5] sm:$0x1] %v21
    // Predicated region
    $region10: #{tpu_custom_call.1} parent=1 // pred_check
      _
    $region11: #{tpu_custom_call.1} parent=1 // pred_check_branch
      %24 = sbr.rel (0) target = $region13
    $region12: #{tpu_custom_call.1} parent=1 // pred_region
      %s26 = ssub.s32 16, 16
      %27 = vsyncadd [#allocation4], %s26
      %s29 = sshll.u32 [#allocation5], 4
      %s30 = int_to_ptr.vmem [resolvable:$true] %s29
      %32 = dma.vmem_to_hbm [thread:$0]  %s30, 16, %s1, [#allocation4]
    $region13: #{tpu_custom_call.1} parent=1 // pred_fallthru
      _
    // Predicated region
    $region14: #{tpu_custom_call.1} parent=1 // pred_check
      _
    $region15: #{tpu_custom_call.1} parent=1 // pred_check_branch
      %34 = sbr.rel (0) target = $region17
    $region16: #{tpu_custom_call.1} parent=1 // pred_region
      %35 = dma.done [#allocation4], 16
    $region17: #{tpu_custom_call.1} parent=1 // pred_fallthru
      _
    %36 = vsyncpa [#allocation3], 1
    %37 = vsyncpa [#allocation4], 1

</llo_original>
